<compile_context>
chip_gen: v5e
topology: v5e:2x2
jax: 0.10.0
libtpu: 0.0.40
codegen_flags: <defaults>
</compile_context>

<pallas_src>
import functools

import jax
import jax.numpy as jnp
from jax.experimental import pallas as pl
from jax.experimental.pallas import tpu as pltpu


def _round_up(x: int, m: int) -> int:
    return ((x + m - 1) // m) * m


def decoder_kernel(x_ref, w1_ref, b1_ref, w2_ref, b2_ref, o_ref):
    # hidden = relu(x @ W1 + b1)        (TB, Zp) @ (Zp, Hp) -> (TB, Hp)
    h = jnp.dot(x_ref[...], w1_ref[...], preferred_element_type=jnp.float32)
    h = h + b1_ref[...]                 # (TB, Hp) + (1, Hp) broadcast
    h = jnp.maximum(h, 0.0)
    # predicted = sigmoid(h @ W2 + b2)  (TB, Hp) @ (Hp, Op) -> (TB, Op)
    y = jnp.dot(h, w2_ref[...], preferred_element_type=jnp.float32)
    y = y + b2_ref[...]                 # (TB, Op) + (1, Op) broadcast
    o_ref[...] = jax.nn.sigmoid(y).astype(o_ref.dtype)


@functools.partial(jax.jit, static_argnames=("tb",))
def decoder_forward(x, w1, b1, w2, b2, *, tb: int = 512):
    """Pallas equivalent of Decoder.forward.

    Args:
      x:  (B, Z)  input.
      w1: (Z, H)  first-layer weight, transposed vs. nn.Linear.weight.
      b1: (H,)    first-layer bias.
      w2: (H, O)  second-layer weight, transposed vs. nn.Linear.weight.
      b2: (O,)    second-layer bias.
      tb: batch tile size (clamped to the padded batch; multiple of 8/128).
    """
    B, Z = x.shape
    H = w1.shape[1]
    O = w2.shape[1]

    # Pad feature dims to 128 lanes (lane-dense stores, aligned MXU tiles),
    # batch to a multiple of the batch tile (>= 8 sublanes).
    Zp = _round_up(Z, 128)
    Hp = _round_up(H, 128)
    Op = _round_up(O, 128)
    TB = min(tb, _round_up(B, 8))
    Bp = _round_up(B, TB)

    f32 = jnp.float32
    xp = jnp.zeros((Bp, Zp), x.dtype).at[:B, :Z].set(x)
    w1p = jnp.zeros((Zp, Hp), f32).at[:Z, :H].set(w1)
    b1p = jnp.zeros((1, Hp), f32).at[0, :H].set(b1)
    w2p = jnp.zeros((Hp, Op), f32).at[:H, :O].set(w2)
    b2p = jnp.zeros((1, Op), f32).at[0, :O].set(b2)

    grid = (Bp // TB,)

    # Scheduler hint for XLA (the decoder is usually one small op in a big graph).
    cost = pl.CostEstimate(
        flops=2 * Bp * (Zp * Hp + Hp * Op),
        transcendentals=Bp * Op,  # sigmoid
        bytes_accessed=4 * (Bp * Zp + Zp * Hp + Hp + Hp * Op + Op + Bp * Op),
    )

    # VMEM budget: double-buffered x/out tiles + resident weights + hidden tile.
    vmem_bytes = 4 * (2 * TB * (Zp + Op) + 2 * (Zp * Hp + Hp * Op + Hp + Op) + TB * Hp)
    vmem_limit = min(max(vmem_bytes + (1 << 20), 4 << 20), 32 << 20)

    out_padded = pl.pallas_call(
        decoder_kernel,
        out_shape=jax.ShapeDtypeStruct((Bp, Op), x.dtype),
        grid=grid,
        in_specs=[
            pl.BlockSpec((TB, Zp), lambda i: (i, 0)),   # x: tiled over batch
            pl.BlockSpec((Zp, Hp), lambda i: (0, 0)),   # W1: VMEM-resident
            pl.BlockSpec((1, Hp), lambda i: (0, 0)),    # b1: VMEM-resident
            pl.BlockSpec((Hp, Op), lambda i: (0, 0)),   # W2: VMEM-resident
            pl.BlockSpec((1, Op), lambda i: (0, 0)),    # b2: VMEM-resident
        ],
        out_specs=pl.BlockSpec((TB, Op), lambda i: (i, 0)),
        compiler_params=pltpu.CompilerParams(
            dimension_semantics=("parallel",),          # batch tiles are independent
            vmem_limit_bytes=vmem_limit,
        ),
        cost_estimate=cost,
    )(xp, w1p, b1p, w2p, b2p)

    # Drop the batch / output-feature padding (padded sigmoid columns are 0.5).
    return out_padded[:B, :O]


if __name__ == "__main__":
    # Small shapes consistent with Decoder(z_dim, hidden_dim, output_dim).
    # B is large enough (with tb=128) to exercise the multi-tile batch grid.
    B, Z, H, O = 256, 16, 32, 64

    key = jax.random.PRNGKey(0)
    kx, kw1, kb1, kw2, kb2 = jax.random.split(key, 5)

    x = jax.random.normal(kx, (B, Z), dtype=jnp.float32)
    # Deterministic parameter init (PyTorch-like uniform scaling); stored as
    # (in_features, out_features), i.e. the transpose of nn.Linear.weight.
    w1 = jax.random.uniform(kw1, (Z, H), jnp.float32, -1.0, 1.0) / jnp.sqrt(Z)
    b1 = jax.random.uniform(kb1, (H,), jnp.float32, -1.0, 1.0) / jnp.sqrt(Z)
    w2 = jax.random.uniform(kw2, (H, O), jnp.float32, -1.0, 1.0) / jnp.sqrt(H)
    b2 = jax.random.uniform(kb2, (O,), jnp.float32, -1.0, 1.0) / jnp.sqrt(H)

    out = decoder_forward(x, w1, b1, w2, b2, tb=128)
    jax.block_until_ready(out)

    # Reference check in plain JAX (same semantics as the PyTorch forward).
    ref = jax.nn.sigmoid(jnp.maximum(x @ w1 + b1, 0.0) @ w2 + b2)
    assert out.shape == (B, O)
    assert jnp.allclose(out, ref, atol=1e-5, rtol=1e-5)

    print("KERNEL_OK")
</pallas_src>

<mosaic_0001>
module attributes {stable_mosaic.version = 11 : i64} {
  func.func @decoder_kernel(%arg0: i32, %arg1: memref<128x128xf32, #tpu.memory_space<vmem>>, %arg2: memref<128x128xf32, #tpu.memory_space<vmem>>, %arg3: memref<1x128xf32, #tpu.memory_space<vmem>>, %arg4: memref<128x128xf32, #tpu.memory_space<vmem>>, %arg5: memref<1x128xf32, #tpu.memory_space<vmem>>, %arg6: memref<128x128xf32, #tpu.memory_space<vmem>>) attributes {dimension_semantics = [#tpu.dimension_semantics<parallel>], iteration_bounds = array<i64: 2>, scalar_prefetch = 0 : i64, scratch_operands = 0 : i64, tpu.core_type = #tpu.core_type<tc>, window_params = [{transform_indices = @transform_0, window_bounds = array<i64: 128, 128>}, {pipeline_mode = #tpu.pipeline_mode<synchronous>, transform_indices = @transform_1, window_bounds = array<i64: 128, 128>}, {pipeline_mode = #tpu.pipeline_mode<synchronous>, transform_indices = @transform_2, window_bounds = array<i64: 1, 128>}, {pipeline_mode = #tpu.pipeline_mode<synchronous>, transform_indices = @transform_3, window_bounds = array<i64: 128, 128>}, {pipeline_mode = #tpu.pipeline_mode<synchronous>, transform_indices = @transform_4, window_bounds = array<i64: 1, 128>}, {transform_indices = @transform_5, window_bounds = array<i64: 128, 128>}]} {
    %c0 = arith.constant 0 : index
    %c0_0 = arith.constant 0 : index
    %0 = vector.load %arg1[%c0, %c0_0] : memref<128x128xf32, #tpu.memory_space<vmem>>, vector<128x128xf32>
    %c0_1 = arith.constant 0 : index
    %c0_2 = arith.constant 0 : index
    %1 = vector.load %arg2[%c0_1, %c0_2] : memref<128x128xf32, #tpu.memory_space<vmem>>, vector<128x128xf32>
    %cst = arith.constant dense<0.000000e+00> : vector<128x128xf32>
    %2 = tpu.matmul %0, %1, %cst {dimension_numbers = #tpu.dot_dimension_numbers<[1], [0], [0], [1], [0, 0, 1, 1], [], []>} : vector<128x128xf32>, vector<128x128xf32>, vector<128x128xf32> -> vector<128x128xf32>
    %c0_3 = arith.constant 0 : index
    %c0_4 = arith.constant 0 : index
    %3 = vector.load %arg3[%c0_3, %c0_4] : memref<1x128xf32, #tpu.memory_space<vmem>>, vector<1x128xf32>
    %4 = vector.broadcast %3 : vector<1x128xf32> to vector<128x128xf32>
    %5 = arith.addf %2, %4 : vector<128x128xf32>
    %cst_5 = arith.constant 0.000000e+00 : f32
    %6 = vector.broadcast %cst_5 : f32 to vector<128x128xf32>
    %7 = arith.maximumf %5, %6 : vector<128x128xf32>
    %c0_6 = arith.constant 0 : index
    %c0_7 = arith.constant 0 : index
    %8 = vector.load %arg4[%c0_6, %c0_7] : memref<128x128xf32, #tpu.memory_space<vmem>>, vector<128x128xf32>
    %cst_8 = arith.constant dense<0.000000e+00> : vector<128x128xf32>
    %9 = tpu.matmul %7, %8, %cst_8 {dimension_numbers = #tpu.dot_dimension_numbers<[1], [0], [0], [1], [0, 0, 1, 1], [], []>} : vector<128x128xf32>, vector<128x128xf32>, vector<128x128xf32> -> vector<128x128xf32>
    %c0_9 = arith.constant 0 : index
    %c0_10 = arith.constant 0 : index
    %10 = vector.load %arg5[%c0_9, %c0_10] : memref<1x128xf32, #tpu.memory_space<vmem>>, vector<1x128xf32>
    %11 = vector.broadcast %10 : vector<1x128xf32> to vector<128x128xf32>
    %12 = arith.addf %9, %11 : vector<128x128xf32>
    %13 = arith.negf %12 : vector<128x128xf32>
    %14 = math.exp %13 : vector<128x128xf32>
    %cst_11 = arith.constant 1.000000e+00 : f32
    %15 = vector.broadcast %cst_11 : f32 to vector<128x128xf32>
    %16 = arith.addf %15, %14 : vector<128x128xf32>
    %17 = arith.divf %15, %16 : vector<128x128xf32>
    %c0_12 = arith.constant 0 : index
    %c0_13 = arith.constant 0 : index
    %18 = vector.load %arg6[%c0_12, %c0_13] : memref<128x128xf32, #tpu.memory_space<vmem>>, vector<128x128xf32>
    tpu.vector_store %arg6[%c0_12, %c0_13], %17 {strides = array<i32>} : memref<128x128xf32, #tpu.memory_space<vmem>>, vector<128x128xf32>,
    return
  }
  func.func @transform_0(%arg0: i32) -> (i32, i32) {
    %c0_i32 = arith.constant 0 : i32
    %c0_i32_0 = arith.constant 0 : i32
    return %arg0, %c0_i32 : i32, i32
  }
  func.func @transform_1(%arg0: i32) -> (i32, i32) {
    %c0_i32 = arith.constant 0 : i32
    %c0_i32_0 = arith.constant 0 : i32
    %c0_i32_1 = arith.constant 0 : i32
    return %c0_i32, %c0_i32_0 : i32, i32
  }
  func.func @transform_2(%arg0: i32) -> (i32, i32) {
    %c0_i32 = arith.constant 0 : i32
    %c0_i32_0 = arith.constant 0 : i32
    %c0_i32_1 = arith.constant 0 : i32
    return %c0_i32, %c0_i32_0 : i32, i32
  }
  func.func @transform_3(%arg0: i32) -> (i32, i32) {
    %c0_i32 = arith.constant 0 : i32
    %c0_i32_0 = arith.constant 0 : i32
    %c0_i32_1 = arith.constant 0 : i32
    return %c0_i32, %c0_i32_0 : i32, i32
  }
  func.func @transform_4(%arg0: i32) -> (i32, i32) {
    %c0_i32 = arith.constant 0 : i32
    %c0_i32_0 = arith.constant 0 : i32
    %c0_i32_1 = arith.constant 0 : i32
    return %c0_i32, %c0_i32_0 : i32, i32
  }
  func.func @transform_5(%arg0: i32) -> (i32, i32) {
    %c0_i32 = arith.constant 0 : i32
    %c0_i32_0 = arith.constant 0 : i32
    return %arg0, %c0_i32 : i32, i32
  }
}

</mosaic_0001>

<llo_original>
// kernel: decoder_forward.1
$region0: #{decoder_forward.1}
  #allocation0 [shape = 'u32[]', space=smem, size = 0x4, offset = 0x4, fixed_abs, tag = 'smem constant byte address 0x4 - core index']
  #allocation1 [shape = 'u32[72,128]{1,0:T(1,128)}', space=vmem, size = 0x9000, scoped, tag = 'internal scratch']
  %s0 = inlined_call_operand.vmem [shape: f32[256,128], index: 0, kind: input, shape index: {}]
  %s1 = inlined_call_operand.vmem [shape: f32[128,128], index: 1, kind: input, shape index: {}]
  %s2 = inlined_call_operand.vmem [shape: f32[1,128], index: 2, kind: input, shape index: {}]
  %s3 = inlined_call_operand.vmem [shape: f32[128,128], index: 3, kind: input, shape index: {}]
  %s4 = inlined_call_operand.vmem [shape: f32[1,128], index: 4, kind: input, shape index: {}]
  %s5 = inlined_call_operand.vmem [shape: f32[256,128], index: 5, kind: output, shape index: {}]
  %s6 = sld [smem:[#allocation0]]
  $region53: #{decoder_forward.1} parent=0
    _
  %s8 = ssub.s32 1, %s6
  %s9 = scalar_select 0, %s8, %s6
  loop: start=0, step=1, limit=4
  $region2: #{decoder_forward.1} parent=0 // loop_pre_header
    _
  $region3: #{decoder_forward.1} parent=0 // loop_header
    %s11 = sphi 0, %s15
    %p12 = scmp.ge.s32.totalorder %s11, 4
    %s21 = sphi 0, %s23
    %s24 = sphi 0, %s21
    %s25 = sphi 0, %s24
    %s41 = sphi 0, %s25
    %s45 = sphi 0, %s45
    %s47 = sphi 0, %s45
    %s48 = sphi 0, %s47
    %s62 = sphi 0, %s48
    %s66 = sphi 0, %s66
    %s68 = sphi 0, %s66
    %s69 = sphi 0, %s68
    %s83 = sphi 0, %s69
    %s87 = sphi 0, %s87
    %s89 = sphi 0, %s87
    %s90 = sphi 0, %s89
    %s104 = sphi 0, %s90
    %s108 = sphi 0, %s108
    %s110 = sphi 0, %s108
    %s111 = sphi 0, %s110
    %s125 = sphi 0, %s111
    %s131 = sphi 0, %s133
    %s134 = sphi 0, %s131
    %s135 = sphi 0, %s134
    %s151 = sphi 0, %s135
  $region4: #{decoder_forward.1} parent=0 // loop_header_branch
    %14 = sbr.rel (%p12) target = $region8
  $region5: #{decoder_forward.1} parent=0 // loop_body
    %s16 = ssub.s32 %s11, 1
    %s17 = ssub.s32 %s11, 2
    %s18 = sadd.s32 %s11, 1
    %s19 = ssub.s32 %s11, %s18
    %p20 = scmp.eq.s32.totalorder %s19, 0
    %s22 = sadd.s32 %s21, 1
    %s23 = scalar_select %p20, %s21, %s22
    %p26 = pneg %p20
    %p27 = scmp.eq.s32.totalorder %s11, 1
    %p28 = por %p26, %p27
    %p29 = scmp.ne.s32.totalorder %s21, %s24
    %p30 = scmp.eq.s32.totalorder %s11, 0
    %p31 = por %p29, %p30
    %p32 = scmp.ne.s32.totalorder %s21, %s24
    %p33 = scmp.eq.s32.totalorder %s16, 1
    %p34 = por %p32, %p33
    %p35 = scmp.ne.s32.totalorder %s24, %s25
    %p36 = scmp.eq.s32.totalorder %s16, 0
    %p37 = por %p35, %p36
    %p38 = scmp.ne.s32.totalorder %s24, %s25
    %p39 = scmp.eq.s32.totalorder %s17, 1
    %p40 = por %p38, %p39
    %p42 = scmp.ne.s32.totalorder %s25, %s41
    %p43 = scmp.eq.s32.totalorder %s17, 0
    %p44 = por %p42, %p43
    %s46 = sadd.s32 %s45, 1
    %p49 = scmp.eq.s32.totalorder %s11, 1
    %p50 = scmp.ne.s32.totalorder %s45, %s47
    %p51 = scmp.eq.s32.totalorder %s11, 0
    %p52 = por %p50, %p51
    %p53 = scmp.ne.s32.totalorder %s45, %s47
    %p54 = scmp.eq.s32.totalorder %s16, 1
    %p55 = por %p53, %p54
    %p56 = scmp.ne.s32.totalorder %s47, %s48
    %p57 = scmp.eq.s32.totalorder %s16, 0
    %p58 = por %p56, %p57
    %p59 = scmp.ne.s32.totalorder %s47, %s48
    %p60 = scmp.eq.s32.totalorder %s17, 1
    %p61 = por %p59, %p60
    %p63 = scmp.ne.s32.totalorder %s48, %s62
    %p64 = scmp.eq.s32.totalorder %s17, 0
    %p65 = por %p63, %p64
    %s67 = sadd.s32 %s66, 1
    %p70 = scmp.eq.s32.totalorder %s11, 1
    %p71 = scmp.ne.s32.totalorder %s66, %s68
    %p72 = scmp.eq.s32.totalorder %s11, 0
    %p73 = por %p71, %p72
    %p74 = scmp.ne.s32.totalorder %s66, %s68
    %p75 = scmp.eq.s32.totalorder %s16, 1
    %p76 = por %p74, %p75
    %p77 = scmp.ne.s32.totalorder %s68, %s69
    %p78 = scmp.eq.s32.totalorder %s16, 0
    %p79 = por %p77, %p78
    %p80 = scmp.ne.s32.totalorder %s68, %s69
    %p81 = scmp.eq.s32.totalorder %s17, 1
    %p82 = por %p80, %p81
    %p84 = scmp.ne.s32.totalorder %s69, %s83
    %p85 = scmp.eq.s32.totalorder %s17, 0
    %p86 = por %p84, %p85
    %s88 = sadd.s32 %s87, 1
    %p91 = scmp.eq.s32.totalorder %s11, 1
    %p92 = scmp.ne.s32.totalorder %s87, %s89
    %p93 = scmp.eq.s32.totalorder %s11, 0
    %p94 = por %p92, %p93
    %p95 = scmp.ne.s32.totalorder %s87, %s89
    %p96 = scmp.eq.s32.totalorder %s16, 1
    %p97 = por %p95, %p96
    %p98 = scmp.ne.s32.totalorder %s89, %s90
    %p99 = scmp.eq.s32.totalorder %s16, 0
    %p100 = por %p98, %p99
    %p101 = scmp.ne.s32.totalorder %s89, %s90
    %p102 = scmp.eq.s32.totalorder %s17, 1
    %p103 = por %p101, %p102
    %p105 = scmp.ne.s32.totalorder %s90, %s104
    %p106 = scmp.eq.s32.totalorder %s17, 0
    %p107 = por %p105, %p106
    %s109 = sadd.s32 %s108, 1
    %p112 = scmp.eq.s32.totalorder %s11, 1
    %p113 = scmp.ne.s32.totalorder %s108, %s110
    %p114 = scmp.eq.s32.totalorder %s11, 0
    %p115 = por %p113, %p114
    %p116 = scmp.ne.s32.totalorder %s108, %s110
    %p117 = scmp.eq.s32.totalorder %s16, 1
    %p118 = por %p116, %p117
    %p119 = scmp.ne.s32.totalorder %s110, %s111
    %p120 = scmp.eq.s32.totalorder %s16, 0
    %p121 = por %p119, %p120
    %p122 = scmp.ne.s32.totalorder %s110, %s111
    %p123 = scmp.eq.s32.totalorder %s17, 1
    %p124 = por %p122, %p123
    %p126 = scmp.ne.s32.totalorder %s111, %s125
    %p127 = scmp.eq.s32.totalorder %s17, 0
    %p128 = por %p126, %p127
    %s129 = ssub.s32 %s11, %s18
    %p130 = scmp.eq.s32.totalorder %s129, 0
    %s132 = sadd.s32 %s131, 1
    %s133 = scalar_select %p130, %s131, %s132
    %p136 = pneg %p130
    %p137 = scmp.eq.s32.totalorder %s11, 1
    %p138 = por %p136, %p137
    %p139 = scmp.ne.s32.totalorder %s131, %s134
    %p140 = scmp.eq.s32.totalorder %s11, 0
    %p141 = por %p139, %p140
    %p142 = scmp.ne.s32.totalorder %s131, %s134
    %p143 = scmp.eq.s32.totalorder %s16, 1
    %p144 = por %p142, %p143
    %p145 = scmp.ne.s32.totalorder %s134, %s135
    %p146 = scmp.eq.s32.totalorder %s16, 0
    %p147 = por %p145, %p146
    %p148 = scmp.ne.s32.totalorder %s134, %s135
    %p149 = scmp.eq.s32.totalorder %s17, 1
    %p150 = por %p148, %p149
    %p152 = scmp.ne.s32.totalorder %s135, %s151
    %p153 = scmp.eq.s32.totalorder %s17, 0
    %p154 = por %p152, %p153
    %p155 = scmp.le.s32.totalorder 1, %s11
    %p156 = scmp.lt.s32.totalorder %s11, 3
    %p157 = pnand %p155, %p156
    %p158 = pneg %p157
    // Predicated region
    $region9: #{decoder_forward.1} parent=5 // pred_check
      _
    $region10: #{decoder_forward.1} parent=5 // pred_check_branch
      %160 = sbr.rel (%p157) target = $region12
    $region11: #{decoder_forward.1} parent=5 // pred_region
      %s161 = ssub.s32 %s11, 1
      // Predicated region
      $region13: #{decoder_forward.1} parent=11 // pred_check
        %p162 = pneg %p58
      $region14: #{decoder_forward.1} parent=11 // pred_check_branch
        %164 = sbr.rel (%p162) target = $region16
      $region15: #{decoder_forward.1} parent=11 // pred_region
        _
      $region16: #{decoder_forward.1} parent=11 // pred_fallthru
        _
      // Predicated region
      $region17: #{decoder_forward.1} parent=11 // pred_check
        %p165 = pneg %p79
      $region18: #{decoder_forward.1} parent=11 // pred_check_branch
        %167 = sbr.rel (%p165) target = $region20
      $region19: #{decoder_forward.1} parent=11 // pred_region
        _
      $region20: #{decoder_forward.1} parent=11 // pred_fallthru
        _
      // Predicated region
      $region21: #{decoder_forward.1} parent=11 // pred_check
        %p168 = pneg %p100
      $region22: #{decoder_forward.1} parent=11 // pred_check_branch
        %170 = sbr.rel (%p168) target = $region24
      $region23: #{decoder_forward.1} parent=11 // pred_region
        _
      $region24: #{decoder_forward.1} parent=11 // pred_fallthru
        _
      // Predicated region
      $region25: #{decoder_forward.1} parent=11 // pred_check
        %p171 = pneg %p121
      $region26: #{decoder_forward.1} parent=11 // pred_check_branch
        %173 = sbr.rel (%p171) target = $region28
      $region27: #{decoder_forward.1} parent=11 // pred_region
        _
      $region28: #{decoder_forward.1} parent=11 // pred_fallthru
        _
    $region12: #{decoder_forward.1} parent=5 // pred_fallthru
      _
    %p174 = scmp.lt.s32.totalorder %s11, 2
    // Predicated region
    $region29: #{decoder_forward.1} parent=5 // pred_check
      %p175 = pneg %p174
    $region30: #{decoder_forward.1} parent=5 // pred_check_branch
      %177 = sbr.rel (%p175) target = $region32
    $region31: #{decoder_forward.1} parent=5 // pred_region
      // Predicated region
      $region33: #{decoder_forward.1} parent=31 // pred_check
        %p178 = pneg %p31
      $region34: #{decoder_forward.1} parent=31 // pred_check_branch
        %180 = sbr.rel (%p178) target = $region36
      $region35: #{decoder_forward.1} parent=31 // pred_region
        %s181 = smul.u32 16, %s11
        %p182 = scmp.lt.s32.totalorder %s181, 31
        %s183 = scalar_select %p182, %s181, 31
        %s184 = smul.addr %s183, 8
        %s185 = scalar_lea.vmem %s0, %s184
        %s186 = smul.u32 16, %s11
      $region36: #{decoder_forward.1} parent=31 // pred_fallthru
        _
    $region32: #{decoder_forward.1} parent=5 // pred_fallthru
      _
    %p187 = scmp.le.s32.totalorder 1, %s11
    %p188 = scmp.lt.s32.totalorder %s11, 3
    %p189 = pnand %p187, %p188
    %p190 = pneg %p189
    // Predicated region
    $region37: #{decoder_forward.1} parent=5 // pred_check
      _
    $region38: #{decoder_forward.1} parent=5 // pred_check_branch
      %192 = sbr.rel (%p189) target = $region40
    $region39: #{decoder_forward.1} parent=5 // pred_region
      %s193 = ssub.s32 %s11, 1
      %s194 = smul.u32 16, %s16
      %p195 = scmp.lt.s32.totalorder %s194, 31
      %s196 = scalar_select %p195, %s194, 31
      %s197 = smul.addr %s196, 8
      %s198 = scalar_lea.vmem %s0, %s197
      %p199 = pneg %p37
      %p200 = pneg %p34
      %p201 = pneg %p58
      %p202 = pneg %p55
      %p203 = pneg %p79
      %p204 = pneg %p76
      %p205 = pneg %p100
      %p206 = pneg %p97
      %p207 = pneg %p121
      %p208 = pneg %p118
      %p209 = pneg %p147
      %p210 = pneg %p144
      %s211 = smul.u32 16, %s16
      %p212 = scmp.lt.s32.totalorder %s211, 31
      %s213 = scalar_select %p212, %s211, 31
      %s214 = smul.addr %s213, 8
      %s215 = scalar_lea.vmem %s5, %s214
      %s216 = smul.u32 16, %s16
      %p217 = scmp.lt.s32.totalorder %s216, 31
      %s218 = scalar_select %p217, %s216, 31
      %s219 = smul.addr %s218, 8
      %s220 = scalar_lea.vmem %s0, %s219
      %s221 = smul.u32 16, %s16
      %s222 = smul.u32 16, %s16
      %p223 = scmp.lt.s32.totalorder %s222, 31
      %s224 = scalar_select %p223, %s222, 31
      %s225 = smul.addr %s224, 8
      %s226 = scalar_lea.vmem %s5, %s225
      %s227 = smul.u32 16, %s16
      %v228 = vld [vmem:[%s220] sm:$0xff]
      %v229 = vld [vmem:[%s220 + $0x8] sm:$0xff]
      %v230 = vld [vmem:[%s220 + $0x10] sm:$0xff]
      %v231 = vld [vmem:[%s220 + $0x18] sm:$0xff]
      %v232 = vld [vmem:[%s220 + $0x20] sm:$0xff]
      %v233 = vld [vmem:[%s220 + $0x28] sm:$0xff]
      %v234 = vld [vmem:[%s220 + $0x30] sm:$0xff]
      %v235 = vld [vmem:[%s220 + $0x38] sm:$0xff]
      %v236 = vld [vmem:[%s220 + $0x40] sm:$0xff]
      %v237 = vld [vmem:[%s220 + $0x48] sm:$0xff]
      %v238 = vld [vmem:[%s220 + $0x50] sm:$0xff]
      %v239 = vld [vmem:[%s220 + $0x58] sm:$0xff]
      %v240 = vld [vmem:[%s220 + $0x60] sm:$0xff]
      %v241 = vld [vmem:[%s220 + $0x68] sm:$0xff]
      %v242 = vld [vmem:[%s220 + $0x70] sm:$0xff]
      %v243 = vld [vmem:[%s220 + $0x78] sm:$0xff]
      %v244 = vld [vmem:[%s1] sm:$0xff]
      %v245 = vld [vmem:[%s1 + $0x8] sm:$0xff]
      %v246 = vld [vmem:[%s1 + $0x10] sm:$0xff]
      %v247 = vld [vmem:[%s1 + $0x18] sm:$0xff]
      %v248 = vld [vmem:[%s1 + $0x20] sm:$0xff]
      %v249 = vld [vmem:[%s1 + $0x28] sm:$0xff]
      %v250 = vld [vmem:[%s1 + $0x30] sm:$0xff]
      %v251 = vld [vmem:[%s1 + $0x38] sm:$0xff]
      %v252 = vld [vmem:[%s1 + $0x40] sm:$0xff]
      %v253 = vld [vmem:[%s1 + $0x48] sm:$0xff]
      %v254 = vld [vmem:[%s1 + $0x50] sm:$0xff]
      %v255 = vld [vmem:[%s1 + $0x58] sm:$0xff]
      %v256 = vld [vmem:[%s1 + $0x60] sm:$0xff]
      %v257 = vld [vmem:[%s1 + $0x68] sm:$0xff]
      %v258 = vld [vmem:[%s1 + $0x70] sm:$0xff]
      %v259 = vld [vmem:[%s1 + $0x78] sm:$0xff]
      %v260 = vld [vmem:[%s2] sm:$0x1]
      %v262 = vperm.slane %v260, 0
      %264 = vmatpush.msra.mxu0 %v259
      %265 = vmatpush.msra.mxu0 %v258
      %266 = vmatpush.msra.mxu0 %v257
      %267 = vmatpush.msra.mxu0 %v256
      %268 = vmatpush.msra.mxu0 %v255
      %269 = vmatpush.msra.mxu0 %v254
      %270 = vmatpush.msra.mxu0 %v253
      %271 = vmatpush.msra.mxu0 %v252
      %272 = vmatpush.msra.mxu0 %v251
      %273 = vmatpush.msra.mxu0 %v250
      %274 = vmatpush.msra.mxu0 %v249
      %275 = vmatpush.msra.mxu0 %v248
      %276 = vmatpush.msra.mxu0 %v247
      %277 = vmatpush.msra.mxu0 %v246
      %278 = vmatpush.msra.mxu0 %v245
      %279 = vmatpush.msra.mxu0 %v244
      %280 = vmatmul.f32.gmra.mxu0 %v228
      %v281 = vpop.f32.mrf.mxu0
      %v282 = vadd.f32 %v262, %v281
      %283 = vmatmul.f32.gmra.mxu0 %v229
      %v284 = vpop.f32.mrf.mxu0
      %v285 = vadd.f32 %v262, %v284
      %286 = vmatmul.f32.gmra.mxu0 %v230
      %v287 = vpop.f32.mrf.mxu0
      %v288 = vadd.f32 %v262, %v287
      %289 = vmatmul.f32.gmra.mxu0 %v231
      %v290 = vpop.f32.mrf.mxu0
      %v291 = vadd.f32 %v262, %v290
      %292 = vmatmul.f32.gmra.mxu0 %v232
      %v293 = vpop.f32.mrf.mxu0
      %v294 = vadd.f32 %v262, %v293
      %295 = vmatmul.f32.gmra.mxu0 %v233
      %v296 = vpop.f32.mrf.mxu0
      %v297 = vadd.f32 %v262, %v296
      %298 = vmatmul.f32.gmra.mxu0 %v234
      %v299 = vpop.f32.mrf.mxu0
      %v300 = vadd.f32 %v262, %v299
      %301 = vmatmul.f32.gmra.mxu0 %v235
      %v302 = vpop.f32.mrf.mxu0
      %v303 = vadd.f32 %v262, %v302
      %304 = vmatmul.f32.gmra.mxu0 %v236
      %v305 = vpop.f32.mrf.mxu0
      %v306 = vadd.f32 %v262, %v305
      %307 = vmatmul.f32.gmra.mxu0 %v237
      %v308 = vpop.f32.mrf.mxu0
      %v309 = vadd.f32 %v262, %v308
      %310 = vmatmul.f32.gmra.mxu0 %v238
      %v311 = vpop.f32.mrf.mxu0
      %v312 = vadd.f32 %v262, %v311
      %313 = vmatmul.f32.gmra.mxu0 %v239
      %v314 = vpop.f32.mrf.mxu0
      %v315 = vadd.f32 %v262, %v314
      %316 = vmatmul.f32.gmra.mxu0 %v240
      %v317 = vpop.f32.mrf.mxu0
      %v318 = vadd.f32 %v262, %v317
      %319 = vmatmul.f32.gmra.mxu0 %v241
      %v320 = vpop.f32.mrf.mxu0
      %v321 = vadd.f32 %v262, %v320
      %322 = vmatmul.f32.gmra.mxu0 %v242
      %v323 = vpop.f32.mrf.mxu0
      %v324 = vadd.f32 %v262, %v323
      %325 = vmatmul.f32.gmra.mxu0 %v243
      %v326 = vpop.f32.mrf.mxu0
      %v327 = vadd.f32 %v262, %v326
      %328 = vdwg.mxu0
      %v329 = vmax.f32 %v282, 0.0
      %v330 = vmax.f32 %v285, 0.0
      %v331 = vmax.f32 %v288, 0.0
      %v332 = vmax.f32 %v291, 0.0
      %v333 = vmax.f32 %v294, 0.0
      %v334 = vmax.f32 %v297, 0.0
      %v335 = vmax.f32 %v300, 0.0
      %v336 = vmax.f32 %v303, 0.0
      %v337 = vmax.f32 %v306, 0.0
      %v338 = vmax.f32 %v309, 0.0
      %v339 = vmax.f32 %v312, 0.0
      %v340 = vmax.f32 %v315, 0.0
      %v341 = vmax.f32 %v318, 0.0
      %v342 = vmax.f32 %v321, 0.0
      %v343 = vmax.f32 %v324, 0.0
      %v344 = vmax.f32 %v327, 0.0
      %v345 = vld [vmem:[%s3] sm:$0xff]
      %v346 = vld [vmem:[%s3 + $0x8] sm:$0xff]
      %v347 = vld [vmem:[%s3 + $0x10] sm:$0xff]
      %v348 = vld [vmem:[%s3 + $0x18] sm:$0xff]
      %v349 = vld [vmem:[%s3 + $0x20] sm:$0xff]
      %v350 = vld [vmem:[%s3 + $0x28] sm:$0xff]
      %v351 = vld [vmem:[%s3 + $0x30] sm:$0xff]
      %v352 = vld [vmem:[%s3 + $0x38] sm:$0xff]
      %v353 = vld [vmem:[%s3 + $0x40] sm:$0xff]
      %v354 = vld [vmem:[%s3 + $0x48] sm:$0xff]
      %v355 = vld [vmem:[%s3 + $0x50] sm:$0xff]
      %v356 = vld [vmem:[%s3 + $0x58] sm:$0xff]
      %v357 = vld [vmem:[%s3 + $0x60] sm:$0xff]
      %v358 = vld [vmem:[%s3 + $0x68] sm:$0xff]
      %v359 = vld [vmem:[%s3 + $0x70] sm:$0xff]
      %v360 = vld [vmem:[%s3 + $0x78] sm:$0xff]
      %v361 = vld [vmem:[%s4] sm:$0x1]
      %v363 = vperm.slane %v361, 0
      %365 = vmatpush.msra.mxu0 %v360
      %366 = vmatpush.msra.mxu0 %v359
      %367 = vmatpush.msra.mxu0 %v358
      %368 = vmatpush.msra.mxu0 %v357
      %369 = vmatpush.msra.mxu0 %v356
      %370 = vmatpush.msra.mxu0 %v355
      %371 = vmatpush.msra.mxu0 %v354
      %372 = vmatpush.msra.mxu0 %v353
      %373 = vmatpush.msra.mxu0 %v352
      %374 = vmatpush.msra.mxu0 %v351
      %375 = vmatpush.msra.mxu0 %v350
      %376 = vmatpush.msra.mxu0 %v349
      %377 = vmatpush.msra.mxu0 %v348
      %378 = vmatpush.msra.mxu0 %v347
      %379 = vmatpush.msra.mxu0 %v346
      %380 = vmatpush.msra.mxu0 %v345
      %381 = vmatmul.f32.gmra.mxu0 %v329
      %v382 = vpop.f32.mrf.mxu0
      %v383 = vadd.f32 %v363, %v382
      %384 = vmatmul.f32.gmra.mxu0 %v330
      %v385 = vpop.f32.mrf.mxu0
      %v386 = vadd.f32 %v363, %v385
      %387 = vmatmul.f32.gmra.mxu0 %v331
      %v388 = vpop.f32.mrf.mxu0
      %v389 = vadd.f32 %v363, %v388
      %390 = vmatmul.f32.gmra.mxu0 %v332
      %v391 = vpop.f32.mrf.mxu0
      %v392 = vadd.f32 %v363, %v391
      %393 = vmatmul.f32.gmra.mxu0 %v333
      %v394 = vpop.f32.mrf.mxu0
      %v395 = vadd.f32 %v363, %v394
      %396 = vmatmul.f32.gmra.mxu0 %v334
      %v397 = vpop.f32.mrf.mxu0
      %v398 = vadd.f32 %v363, %v397
      %399 = vmatmul.f32.gmra.mxu0 %v335
      %v400 = vpop.f32.mrf.mxu0
      %v401 = vadd.f32 %v363, %v400
      %402 = vmatmul.f32.gmra.mxu0 %v336
      %v403 = vpop.f32.mrf.mxu0
      %v404 = vadd.f32 %v363, %v403
      %405 = vmatmul.f32.gmra.mxu0 %v337
      %v406 = vpop.f32.mrf.mxu0
      %v407 = vadd.f32 %v363, %v406
      %408 = vmatmul.f32.gmra.mxu0 %v338
      %v409 = vpop.f32.mrf.mxu0
      %v410 = vadd.f32 %v363, %v409
      %411 = vmatmul.f32.gmra.mxu0 %v339
      %v412 = vpop.f32.mrf.mxu0
      %v413 = vadd.f32 %v363, %v412
      %414 = vmatmul.f32.gmra.mxu0 %v340
      %v415 = vpop.f32.mrf.mxu0
      %v416 = vadd.f32 %v363, %v415
      %417 = vmatmul.f32.gmra.mxu0 %v341
      %v418 = vpop.f32.mrf.mxu0
      %v419 = vadd.f32 %v363, %v418
      %420 = vmatmul.f32.gmra.mxu0 %v342
      %v421 = vpop.f32.mrf.mxu0
      %v422 = vadd.f32 %v363, %v421
      %423 = vmatmul.f32.gmra.mxu0 %v343
      %v424 = vpop.f32.mrf.mxu0
      %v425 = vadd.f32 %v363, %v424
      %426 = vmatmul.f32.gmra.mxu0 %v344
      %v427 = vpop.f32.mrf.mxu0
      %v428 = vadd.f32 %v363, %v427
      %429 = vdwg.mxu0
      %v430 = vxor.u32 %v383, 2147483648
      %v431 = vxor.u32 %v386, 2147483648
      %v432 = vxor.u32 %v389, 2147483648
      %v433 = vxor.u32 %v392, 2147483648
      %v434 = vxor.u32 %v395, 2147483648
      %v435 = vxor.u32 %v398, 2147483648
      %v436 = vxor.u32 %v401, 2147483648
      %v437 = vxor.u32 %v404, 2147483648
      %v438 = vxor.u32 %v407, 2147483648
      %v439 = vxor.u32 %v410, 2147483648
      %v440 = vxor.u32 %v413, 2147483648
      %v441 = vxor.u32 %v416, 2147483648
      %v442 = vxor.u32 %v419, 2147483648
      %v443 = vxor.u32 %v422, 2147483648
      %v444 = vxor.u32 %v425, 2147483648
      %v445 = vxor.u32 %v428, 2147483648
      %v446 = vmul.f32 %v430, 1.442695
      %v447 = vpow.pop %v446
      %v448 = vmul.f32 %v431, 1.442695
      %v449 = vpow.pop %v448
      %v450 = vmul.f32 %v432, 1.442695
      %v451 = vpow.pop %v450
      %v452 = vmul.f32 %v433, 1.442695
      %v453 = vpow.pop %v452
      %v454 = vmul.f32 %v434, 1.442695
      %v455 = vpow.pop %v454
      %v456 = vmul.f32 %v435, 1.442695
      %v457 = vpow.pop %v456
      %v458 = vmul.f32 %v436, 1.442695
      %v459 = vpow.pop %v458
      %v460 = vmul.f32 %v437, 1.442695
      %v461 = vpow.pop %v460
      %v462 = vmul.f32 %v438, 1.442695
      %v463 = vpow.pop %v462
      %v464 = vmul.f32 %v439, 1.442695
      %v465 = vpow.pop %v464
      %v466 = vmul.f32 %v440, 1.442695
      %v467 = vpow.pop %v466
      %v468 = vmul.f32 %v441, 1.442695
      %v469 = vpow.pop %v468
      %v470 = vmul.f32 %v442, 1.442695
      %v471 = vpow.pop %v470
      %v472 = vmul.f32 %v443, 1.442695
      %v473 = vpow.pop %v472
      %v474 = vmul.f32 %v444, 1.442695
      %v475 = vpow.pop %v474
      %v476 = vmul.f32 %v445, 1.442695
      %v477 = vpow.pop %v476
      %v478 = vadd.f32 %v447, 1.0
      %v479 = vadd.f32 %v449, 1.0
      %v480 = vadd.f32 %v451, 1.0
      %v481 = vadd.f32 %v453, 1.0
      %v482 = vadd.f32 %v455, 1.0
      %v483 = vadd.f32 %v457, 1.0
      %v484 = vadd.f32 %v459, 1.0
      %v485 = vadd.f32 %v461, 1.0
      %v486 = vadd.f32 %v463, 1.0
      %v487 = vadd.f32 %v465, 1.0
      %v488 = vadd.f32 %v467, 1.0
      %v489 = vadd.f32 %v469, 1.0
      %v490 = vadd.f32 %v471, 1.0
      %v491 = vadd.f32 %v473, 1.0
      %v492 = vadd.f32 %v475, 1.0
      %v493 = vadd.f32 %v477, 1.0
      %v494 = vrcp.pop %v478
      %v495 = vmul.f32 %v478, %v494
      %v496 = vsub.f32 1.0, %v495
      %v497 = vmul.f32 %v494, %v496
      %v498 = vadd.f32 %v494, %v497
      %vm499 = vweird.f32 %v478
      %vm500 = vweird.f32 %v494
      %vm501 = vmor %vm499, %vm500
      %v502 = vsel %vm501, %v494, %v498
      %v503 = vand.u32 2147483647, %v478
      %vm504 = vcmp.eq.f32.partialorder %v503, 8.507059e+37
      %v505 = vand.u32 %v478, 2147483648
      %v506 = vor.u32 1.1754944e-38, %v505
      %v507 = vsel %vm504, %v506, %v502
      %v508 = vmul.f32 1.0, %v507
      %v509 = vrcp.pop %v479
      %v510 = vmul.f32 %v479, %v509
      %v511 = vsub.f32 1.0, %v510
      %v512 = vmul.f32 %v509, %v511
      %v513 = vadd.f32 %v509, %v512
      %vm514 = vweird.f32 %v479
      %vm515 = vweird.f32 %v509
      %vm516 = vmor %vm514, %vm515
      %v517 = vsel %vm516, %v509, %v513
      %v518 = vand.u32 2147483647, %v479
      %vm519 = vcmp.eq.f32.partialorder %v518, 8.507059e+37
      %v520 = vand.u32 %v479, 2147483648
      %v521 = vor.u32 1.1754944e-38, %v520
      %v522 = vsel %vm519, %v521, %v517
      %v523 = vmul.f32 1.0, %v522
      %v524 = vrcp.pop %v480
      %v525 = vmul.f32 %v480, %v524
      %v526 = vsub.f32 1.0, %v525
      %v527 = vmul.f32 %v524, %v526
      %v528 = vadd.f32 %v524, %v527
      %vm529 = vweird.f32 %v480
      %vm530 = vweird.f32 %v524
      %vm531 = vmor %vm529, %vm530
      %v532 = vsel %vm531, %v524, %v528
      %v533 = vand.u32 2147483647, %v480
      %vm534 = vcmp.eq.f32.partialorder %v533, 8.507059e+37
      %v535 = vand.u32 %v480, 2147483648
      %v536 = vor.u32 1.1754944e-38, %v535
      %v537 = vsel %vm534, %v536, %v532
      %v538 = vmul.f32 1.0, %v537
      %v539 = vrcp.pop %v481
      %v540 = vmul.f32 %v481, %v539
      %v541 = vsub.f32 1.0, %v540
      %v542 = vmul.f32 %v539, %v541
      %v543 = vadd.f32 %v539, %v542
      %vm544 = vweird.f32 %v481
      %vm545 = vweird.f32 %v539
      %vm546 = vmor %vm544, %vm545
      %v547 = vsel %vm546, %v539, %v543
      %v548 = vand.u32 2147483647, %v481
      %vm549 = vcmp.eq.f32.partialorder %v548, 8.507059e+37
      %v550 = vand.u32 %v481, 2147483648
      %v551 = vor.u32 1.1754944e-38, %v550
      %v552 = vsel %vm549, %v551, %v547
      %v553 = vmul.f32 1.0, %v552
      %v554 = vrcp.pop %v482
      %v555 = vmul.f32 %v482, %v554
      %v556 = vsub.f32 1.0, %v555
      %v557 = vmul.f32 %v554, %v556
      %v558 = vadd.f32 %v554, %v557
      %vm559 = vweird.f32 %v482
      %vm560 = vweird.f32 %v554
      %vm561 = vmor %vm559, %vm560
      %v562 = vsel %vm561, %v554, %v558
      %v563 = vand.u32 2147483647, %v482
      %vm564 = vcmp.eq.f32.partialorder %v563, 8.507059e+37
      %v565 = vand.u32 %v482, 2147483648
      %v566 = vor.u32 1.1754944e-38, %v565
      %v567 = vsel %vm564, %v566, %v562
      %v568 = vmul.f32 1.0, %v567
      %v569 = vrcp.pop %v483
      %v570 = vmul.f32 %v483, %v569
      %v571 = vsub.f32 1.0, %v570
      %v572 = vmul.f32 %v569, %v571
      %v573 = vadd.f32 %v569, %v572
      %vm574 = vweird.f32 %v483
      %vm575 = vweird.f32 %v569
      %vm576 = vmor %vm574, %vm575
      %v577 = vsel %vm576, %v569, %v573
      %v578 = vand.u32 2147483647, %v483
      %vm579 = vcmp.eq.f32.partialorder %v578, 8.507059e+37
      %v580 = vand.u32 %v483, 2147483648
      %v581 = vor.u32 1.1754944e-38, %v580
      %v582 = vsel %vm579, %v581, %v577
      %v583 = vmul.f32 1.0, %v582
      %v584 = vrcp.pop %v484
      %v585 = vmul.f32 %v484, %v584
      %v586 = vsub.f32 1.0, %v585
      %v587 = vmul.f32 %v584, %v586
      %v588 = vadd.f32 %v584, %v587
      %vm589 = vweird.f32 %v484
      %vm590 = vweird.f32 %v584
      %vm591 = vmor %vm589, %vm590
      %v592 = vsel %vm591, %v584, %v588
      %v593 = vand.u32 2147483647, %v484
      %vm594 = vcmp.eq.f32.partialorder %v593, 8.507059e+37
      %v595 = vand.u32 %v484, 2147483648
      %v596 = vor.u32 1.1754944e-38, %v595
      %v597 = vsel %vm594, %v596, %v592
      %v598 = vmul.f32 1.0, %v597
      %v599 = vrcp.pop %v485
      %v600 = vmul.f32 %v485, %v599
      %v601 = vsub.f32 1.0, %v600
      %v602 = vmul.f32 %v599, %v601
      %v603 = vadd.f32 %v599, %v602
      %vm604 = vweird.f32 %v485
      %vm605 = vweird.f32 %v599
      %vm606 = vmor %vm604, %vm605
      %v607 = vsel %vm606, %v599, %v603
      %v608 = vand.u32 2147483647, %v485
      %vm609 = vcmp.eq.f32.partialorder %v608, 8.507059e+37
      %v610 = vand.u32 %v485, 2147483648
      %v611 = vor.u32 1.1754944e-38, %v610
      %v612 = vsel %vm609, %v611, %v607
      %v613 = vmul.f32 1.0, %v612
      %v614 = vrcp.pop %v486
      %v615 = vmul.f32 %v486, %v614
      %v616 = vsub.f32 1.0, %v615
      %v617 = vmul.f32 %v614, %v616
      %v618 = vadd.f32 %v614, %v617
      %vm619 = vweird.f32 %v486
      %vm620 = vweird.f32 %v614
      %vm621 = vmor %vm619, %vm620
      %v622 = vsel %vm621, %v614, %v618
      %v623 = vand.u32 2147483647, %v486
      %vm624 = vcmp.eq.f32.partialorder %v623, 8.507059e+37
      %v625 = vand.u32 %v486, 2147483648
      %v626 = vor.u32 1.1754944e-38, %v625
      %v627 = vsel %vm624, %v626, %v622
      %v628 = vmul.f32 1.0, %v627
      %v629 = vrcp.pop %v487
      %v630 = vmul.f32 %v487, %v629
      %v631 = vsub.f32 1.0, %v630
      %v632 = vmul.f32 %v629, %v631
      %v633 = vadd.f32 %v629, %v632
      %vm634 = vweird.f32 %v487
      %vm635 = vweird.f32 %v629
      %vm636 = vmor %vm634, %vm635
      %v637 = vsel %vm636, %v629, %v633
      %v638 = vand.u32 2147483647, %v487
      %vm639 = vcmp.eq.f32.partialorder %v638, 8.507059e+37
      %v640 = vand.u32 %v487, 2147483648
      %v641 = vor.u32 1.1754944e-38, %v640
      %v642 = vsel %vm639, %v641, %v637
      %v643 = vmul.f32 1.0, %v642
      %v644 = vrcp.pop %v488
      %v645 = vmul.f32 %v488, %v644
      %v646 = vsub.f32 1.0, %v645
      %v647 = vmul.f32 %v644, %v646
      %v648 = vadd.f32 %v644, %v647
      %vm649 = vweird.f32 %v488
      %vm650 = vweird.f32 %v644
      %vm651 = vmor %vm649, %vm650
      %v652 = vsel %vm651, %v644, %v648
      %v653 = vand.u32 2147483647, %v488
      %vm654 = vcmp.eq.f32.partialorder %v653, 8.507059e+37
      %v655 = vand.u32 %v488, 2147483648
      %v656 = vor.u32 1.1754944e-38, %v655
      %v657 = vsel %vm654, %v656, %v652
      %v658 = vmul.f32 1.0, %v657
      %v659 = vrcp.pop %v489
      %v660 = vmul.f32 %v489, %v659
      %v661 = vsub.f32 1.0, %v660
      %v662 = vmul.f32 %v659, %v661
      %v663 = vadd.f32 %v659, %v662
      %vm664 = vweird.f32 %v489
      %vm665 = vweird.f32 %v659
      %vm666 = vmor %vm664, %vm665
      %v667 = vsel %vm666, %v659, %v663
      %v668 = vand.u32 2147483647, %v489
      %vm669 = vcmp.eq.f32.partialorder %v668, 8.507059e+37
      %v670 = vand.u32 %v489, 2147483648
      %v671 = vor.u32 1.1754944e-38, %v670
      %v672 = vsel %vm669, %v671, %v667
      %v673 = vmul.f32 1.0, %v672
      %v674 = vrcp.pop %v490
      %v675 = vmul.f32 %v490, %v674
      %v676 = vsub.f32 1.0, %v675
      %v677 = vmul.f32 %v674, %v676
      %v678 = vadd.f32 %v674, %v677
      %vm679 = vweird.f32 %v490
      %vm680 = vweird.f32 %v674
      %vm681 = vmor %vm679, %vm680
      %v682 = vsel %vm681, %v674, %v678
      %v683 = vand.u32 2147483647, %v490
      %vm684 = vcmp.eq.f32.partialorder %v683, 8.507059e+37
      %v685 = vand.u32 %v490, 2147483648
      %v686 = vor.u32 1.1754944e-38, %v685
      %v687 = vsel %vm684, %v686, %v682
      %v688 = vmul.f32 1.0, %v687
      %v689 = vrcp.pop %v491
      %v690 = vmul.f32 %v491, %v689
      %v691 = vsub.f32 1.0, %v690
      %v692 = vmul.f32 %v689, %v691
      %v693 = vadd.f32 %v689, %v692
      %vm694 = vweird.f32 %v491
      %vm695 = vweird.f32 %v689
      %vm696 = vmor %vm694, %vm695
      %v697 = vsel %vm696, %v689, %v693
      %v698 = vand.u32 2147483647, %v491
      %vm699 = vcmp.eq.f32.partialorder %v698, 8.507059e+37
      %v700 = vand.u32 %v491, 2147483648
      %v701 = vor.u32 1.1754944e-38, %v700
      %v702 = vsel %vm699, %v701, %v697
      %v703 = vmul.f32 1.0, %v702
      %v704 = vrcp.pop %v492
      %v705 = vmul.f32 %v492, %v704
      %v706 = vsub.f32 1.0, %v705
      %v707 = vmul.f32 %v704, %v706
      %v708 = vadd.f32 %v704, %v707
      %vm709 = vweird.f32 %v492
      %vm710 = vweird.f32 %v704
      %vm711 = vmor %vm709, %vm710
      %v712 = vsel %vm711, %v704, %v708
      %v713 = vand.u32 2147483647, %v492
      %vm714 = vcmp.eq.f32.partialorder %v713, 8.507059e+37
      %v715 = vand.u32 %v492, 2147483648
      %v716 = vor.u32 1.1754944e-38, %v715
      %v717 = vsel %vm714, %v716, %v712
      %v718 = vmul.f32 1.0, %v717
      %v719 = vrcp.pop %v493
      %v720 = vmul.f32 %v493, %v719
      %v721 = vsub.f32 1.0, %v720
      %v722 = vmul.f32 %v719, %v721
      %v723 = vadd.f32 %v719, %v722
      %vm724 = vweird.f32 %v493
      %vm725 = vweird.f32 %v719
      %vm726 = vmor %vm724, %vm725
      %v727 = vsel %vm726, %v719, %v723
      %v728 = vand.u32 2147483647, %v493
      %vm729 = vcmp.eq.f32.partialorder %v728, 8.507059e+37
      %v730 = vand.u32 %v493, 2147483648
      %v731 = vor.u32 1.1754944e-38, %v730
      %v732 = vsel %vm729, %v731, %v727
      %v733 = vmul.f32 1.0, %v732
      %734 = vst [vmem:[%s226] sm:$0xff] %v508
      %735 = vst [vmem:[%s226 + $0x8] sm:$0xff] %v523
      %736 = vst [vmem:[%s226 + $0x10] sm:$0xff] %v538
      %737 = vst [vmem:[%s226 + $0x18] sm:$0xff] %v553
      %738 = vst [vmem:[%s226 + $0x20] sm:$0xff] %v568
      %739 = vst [vmem:[%s226 + $0x28] sm:$0xff] %v583
      %740 = vst [vmem:[%s226 + $0x30] sm:$0xff] %v598
      %741 = vst [vmem:[%s226 + $0x38] sm:$0xff] %v613
      %742 = vst [vmem:[%s226 + $0x40] sm:$0xff] %v628
      %743 = vst [vmem:[%s226 + $0x48] sm:$0xff] %v643
      %744 = vst [vmem:[%s226 + $0x50] sm:$0xff] %v658
      %745 = vst [vmem:[%s226 + $0x58] sm:$0xff] %v673
      %746 = vst [vmem:[%s226 + $0x60] sm:$0xff] %v688
      %747 = vst [vmem:[%s226 + $0x68] sm:$0xff] %v703
      %748 = vst [vmem:[%s226 + $0x70] sm:$0xff] %v718
      %749 = vst [vmem:[%s226 + $0x78] sm:$0xff] %v733
      %s750 = smul.u32 16, %s16
      %p751 = scmp.lt.s32.totalorder %s750, 31
      %s752 = scalar_select %p751, %s750, 31
      %s753 = smul.addr %s752, 8
      %s754 = scalar_lea.vmem %s5, %s753
      // Predicated region
      $region41: #{decoder_forward.1} parent=39 // pred_check
        %p755 = pneg %p144
      $region42: #{decoder_forward.1} parent=39 // pred_check_branch
        %757 = sbr.rel (%p755) target = $region44
      $region43: #{decoder_forward.1} parent=39 // pred_region
        %s758 = smul.u32 16, %s16
      $region44: #{decoder_forward.1} parent=39 // pred_fallthru
        _
    $region40: #{decoder_forward.1} parent=5 // pred_fallthru
      _
    %p759 = scmp.le.s32.totalorder 2, %s11
    // Predicated region
    $region45: #{decoder_forward.1} parent=5 // pred_check
      %p760 = pneg %p759
    $region46: #{decoder_forward.1} parent=5 // pred_check_branch
      %762 = sbr.rel (%p760) target = $region48
    $region47: #{decoder_forward.1} parent=5 // pred_region
      %s763 = ssub.s32 %s11, 2
      // Predicated region
      $region49: #{decoder_forward.1} parent=47 // pred_check
        %p764 = pneg %p150
      $region50: #{decoder_forward.1} parent=47 // pred_check_branch
        %766 = sbr.rel (%p764) target = $region52
      $region51: #{decoder_forward.1} parent=47 // pred_region
        %s767 = smul.u32 16, %s17
        %p768 = scmp.lt.s32.totalorder %s767, 31
        %s769 = scalar_select %p768, %s767, 31
        %s770 = smul.addr %s769, 8
        %s771 = scalar_lea.vmem %s5, %s770
      $region52: #{decoder_forward.1} parent=47 // pred_fallthru
        _
    $region48: #{decoder_forward.1} parent=5 // pred_fallthru
      _
  $region6: #{decoder_forward.1} parent=0 // loop_footer
    %s15 = sadd.s32 1, %s11
  $region7: #{decoder_forward.1} parent=0 // loop_footer_branch
    %10 = sbr.rel target = $region3
  $region8: #{decoder_forward.1} parent=0 // loop_exit
    _

</llo_original>
